<compile_context>
chip_gen: v7x
topology: tpu7x:2x2x1
jax: 0.10.0
libtpu: 0.0.40
codegen_flags: <defaults>
</compile_context>

<pallas_src>
import jax
import jax.numpy as jnp
from jax.experimental import pallas as pl
from jax.experimental.pallas import tpu as pltpu


def _conv1x1_silu_kernel(w_ref, b_ref, x_ref, o_ref):
    """Per-tile 1x1 conv + SiLU.

    w_ref: (C_out, C_in)          resident in VMEM (constant index_map)
    b_ref: (C_out, 1)             resident in VMEM
    x_ref: (b_blk, C_in, tile_s)  pixels on lanes
    o_ref: (b_blk, C_out, tile_s) lane-dense stores
    """
    b_blk, c_in, _ = x_ref.shape
    bias = b_ref[...].astype(jnp.float32)              # (C_out, 1)
    use_vpu = c_in <= 8                                 # tiny contraction -> skip MXU
    if use_vpu:
        w = w_ref[...].astype(jnp.float32)              # (C_out, C_in)

    for bi in range(b_blk):                             # b_blk is small & static
        if use_vpu:
            x = x_ref[bi].astype(jnp.float32)           # (C_in, tile_s)
            # c_in broadcast FMAs on the VPU: (C_out,1) * (1,tile_s) -> (C_out,tile_s)
            acc = w[:, 0:1] * x[0:1, :] + bias
            for k in range(1, c_in):
                acc = acc + w[:, k:k + 1] * x[k:k + 1, :]
        else:
            acc = jnp.dot(w_ref[...], x_ref[bi],
                          preferred_element_type=jnp.float32) + bias
        # SiLU: exp and reciprocal both go to the EUP (VALU slot stays free).
        sig = pl.reciprocal(1.0 + jnp.exp(-acc), approx=True)
        o_ref[bi] = (acc * sig).astype(o_ref.dtype)


def _vmem_budget_bytes():
    """Scoped-VMEM budget: ~3/4 of physical, capped at 96 MiB (v7x-safe)."""
    try:
        cap = int(pltpu.get_tpu_info().vmem_capacity_bytes)
    except Exception:  # pragma: no cover - conservative fallback
        cap = 64 << 20
    return max(16 << 20, min((cap * 3) // 4, 96 << 20))


def _select_tiling(B, c_in, c_out, S_pad, itemsize, w_bytes, budget):
    """Pick (b_blk, tile_s). tile_s is always a multiple of 128."""
    per_px = (c_in + c_out) * itemsize               # bytes/pixel/batch-row (x + out)
    total = B * S_pad * per_px + w_bytes

    # Small-problem path: fold the whole (small) batch into one block so the
    # ~0.35us per-grid-step overhead is paid only 1-2 times.
    if total <= (2 << 20) and B <= 8:
        if S_pad >= 256:
            # Keep >= 2 balanced grid steps so both v7x TensorCores get work.
            ts = pl.cdiv(pl.cdiv(S_pad, 2), 128) * 128
        else:
            ts = S_pad
        return B, ts

    # General path: one batch row per step, large spatial tiles.
    b_blk = 1
    target = 4 << 20                                  # ~4 MiB x+out per step (2x buffered ~8 MiB)
    ts = target // per_px
    ts_cap = max(128, (budget - w_bytes - (1 << 20)) // (2 * per_px))
    ts = max(128, min(ts, ts_cap, S_pad))
    # Balance the spatial tiles and keep them 128-aligned.
    n_s = pl.cdiv(S_pad, ts)
    ts = pl.cdiv(pl.cdiv(S_pad, n_s), 128) * 128
    # v7x: avoid a single-step grid when B == 1 (two TensorCores per chip).
    if B == 1 and pl.cdiv(S_pad, ts) < 2 and S_pad >= 256:
        ts = pl.cdiv(pl.cdiv(S_pad, 2), 128) * 128
    return b_blk, ts


def conv1x1_silu_pallas(x, w, b):
    """x: (B, C_in, S) with S % 128 == 0, w: (C_out, C_in), b: (C_out,)
    -> (B, C_out, S)."""
    B, c_in, S = x.shape
    c_out = w.shape[0]
    assert S % 128 == 0, "spatial axis must be 128-aligned (wrapper pads)"

    itemsize = jnp.dtype(x.dtype).itemsize
    w_bytes = (w.size * jnp.dtype(w.dtype).itemsize
               + b.size * jnp.dtype(b.dtype).itemsize)
    budget = _vmem_budget_bytes()
    b_blk, ts = _select_tiling(B, c_in, c_out, S, itemsize, w_bytes, budget)

    n_b = B // b_blk
    n_s = pl.cdiv(S, ts)

    b2 = b.reshape(c_out, 1)

    cost = pl.CostEstimate(
        flops=2 * B * S * c_in * c_out,
        transcendentals=B * S * c_out,                 # sigmoid exp (+ recip on EUP)
        bytes_accessed=B * S * (c_in + c_out) * itemsize + w_bytes,
    )

    return pl.pallas_call(
        _conv1x1_silu_kernel,
        out_shape=jax.ShapeDtypeStruct((B, c_out, S), x.dtype),
        grid_spec=pltpu.PrefetchScalarGridSpec(
            num_scalar_prefetch=0,
            grid=(n_b, n_s),
            in_specs=[
                # Weight & bias: constant index_map -> stay resident in VMEM.
                pl.BlockSpec((c_out, c_in), lambda bi, si: (0, 0)),
                pl.BlockSpec((c_out, 1), lambda bi, si: (0, 0)),
                # Input: batch block, channels on sublanes, pixels on lanes.
                pl.BlockSpec((b_blk, c_in, ts), lambda bi, si: (bi, 0, si)),
            ],
            out_specs=pl.BlockSpec((b_blk, c_out, ts), lambda bi, si: (bi, 0, si)),
        ),
        compiler_params=pltpu.CompilerParams(
            dimension_semantics=("parallel", "parallel"),
            vmem_limit_bytes=int(budget),
        ),
        cost_estimate=cost,
    )(w, b2, x)


def timestep_embedder_forward(x_nchw, w_oi, bias):
    """Equivalent of TimestepEmbedder.forward.

    x_nchw: (B, t_dim, H, W)   (PyTorch NCHW layout)
    w_oi:   (emb_dim, t_dim)   (Conv2d weight squeezed from (out, in, 1, 1))
    bias:   (emb_dim,)
    returns (B, emb_dim, H, W)
    """
    B, c_in, H, W = x_nchw.shape
    c_out = w_oi.shape[0]
    S = H * W

    # Reshape only (no transpose): NCHW is already channels-outer, pixels-inner.
    x = x_nchw.reshape(B, c_in, S)

    # Pad spatial axis to a lane multiple only if required.
    S_pad = pl.cdiv(S, 128) * 128
    if S_pad != S:
        x = jnp.pad(x, ((0, 0), (0, 0), (0, S_pad - S)))

    y = conv1x1_silu_pallas(x, w_oi, bias)             # (B, c_out, S_pad)

    if S_pad != S:
        y = y[:, :, :S]
    return y.reshape(B, c_out, H, W)


def _reference_forward(x_nchw, w_oi, bias):
    # Pure-JAX reference: 1x1 conv (channel matmul) + exact SiLU.
    y = jnp.einsum("bchw,oc->bohw", x_nchw, w_oi) + bias[None, :, None, None]
    return y * jax.nn.sigmoid(y)


if __name__ == "__main__":
    # Small shapes consistent with the module: t_dim=4, emb_dim=32, spatial 16x16, batch 2.
    B, t_dim, emb_dim, H, W = 2, 4, 32, 16, 16

    key = jax.random.PRNGKey(0)
    k_x, k_w, k_b = jax.random.split(key, 3)

    x = jax.random.normal(k_x, (B, t_dim, H, W), dtype=jnp.float32)
    # Conv2d weight of shape (out, in, 1, 1), squeezed to (out, in).
    w_oi = jax.random.normal(k_w, (emb_dim, t_dim), dtype=jnp.float32) * 0.1
    bias = jax.random.normal(k_b, (emb_dim,), dtype=jnp.float32) * 0.1

    out = timestep_embedder_forward(x, w_oi, bias)
    out = jax.block_until_ready(out)

    ref = _reference_forward(x, w_oi, bias)
    assert out.shape == (B, emb_dim, H, W)
    # Tolerance loosened slightly: SiLU uses the EUP approx reciprocal.
    assert jnp.allclose(out, ref, atol=5e-3, rtol=5e-3), (
        float(jnp.max(jnp.abs(out - ref))))

    print("KERNEL_OK")
</pallas_src>

<mosaic_0001>
module attributes {stable_mosaic.version = 11 : i64} {
  func.func @_conv1x1_silu_kernel(%arg0: i32, %arg1: i32, %arg2: memref<32x4xf32, #tpu.memory_space<vmem>>, %arg3: memref<32x1xf32, #tpu.memory_space<vmem>>, %arg4: memref<2x4x128xf32, #tpu.memory_space<vmem>>, %arg5: memref<2x32x128xf32, #tpu.memory_space<vmem>>) attributes {dimension_semantics = [#tpu.dimension_semantics<parallel>, #tpu.dimension_semantics<parallel>], iteration_bounds = array<i64: 1, 2>, scalar_prefetch = 0 : i64, scratch_operands = 0 : i64, tpu.core_type = #tpu.core_type<tc>, window_params = [{pipeline_mode = #tpu.pipeline_mode<synchronous>, transform_indices = @transform_0, window_bounds = array<i64: 32, 4>}, {pipeline_mode = #tpu.pipeline_mode<synchronous>, transform_indices = @transform_1, window_bounds = array<i64: 32, 1>}, {transform_indices = @transform_2, window_bounds = array<i64: 2, 4, 128>}, {transform_indices = @transform_3, window_bounds = array<i64: 2, 32, 128>}]} {
    %c0 = arith.constant 0 : index
    %c0_0 = arith.constant 0 : index
    %0 = vector.load %arg3[%c0, %c0_0] : memref<32x1xf32, #tpu.memory_space<vmem>>, vector<32x1xf32>
    %c0_1 = arith.constant 0 : index
    %c0_2 = arith.constant 0 : index
    %1 = vector.load %arg2[%c0_1, %c0_2] : memref<32x4xf32, #tpu.memory_space<vmem>>, vector<32x4xf32>
    %c0_3 = arith.constant 0 : index
    %c0_4 = arith.constant 0 : index
    %c0_5 = arith.constant 0 : index
    %2 = vector.load %arg4[%c0_3, %c0_4, %c0_5] : memref<2x4x128xf32, #tpu.memory_space<vmem>>, vector<1x4x128xf32>
    %3 = vector.shape_cast %2 : vector<1x4x128xf32> to vector<4x128xf32>
    %4 = vector.extract_strided_slice %1 {offsets = [0, 0], sizes = [32, 1], strides = [1, 1]} : vector<32x4xf32> to vector<32x1xf32>
    %5 = vector.extract_strided_slice %3 {offsets = [0, 0], sizes = [1, 128], strides = [1, 1]} : vector<4x128xf32> to vector<1x128xf32>
    %6 = vector.broadcast %4 : vector<32x1xf32> to vector<32x128xf32>
    %7 = vector.broadcast %5 : vector<1x128xf32> to vector<32x128xf32>
    %8 = arith.mulf %6, %7 : vector<32x128xf32>
    %9 = vector.broadcast %0 : vector<32x1xf32> to vector<32x128xf32>
    %10 = arith.addf %8, %9 : vector<32x128xf32>
    %11 = vector.extract_strided_slice %1 {offsets = [0, 1], sizes = [32, 1], strides = [1, 1]} : vector<32x4xf32> to vector<32x1xf32>
    %12 = vector.extract_strided_slice %3 {offsets = [1, 0], sizes = [1, 128], strides = [1, 1]} : vector<4x128xf32> to vector<1x128xf32>
    %13 = vector.broadcast %11 : vector<32x1xf32> to vector<32x128xf32>
    %14 = vector.broadcast %12 : vector<1x128xf32> to vector<32x128xf32>
    %15 = arith.mulf %13, %14 : vector<32x128xf32>
    %16 = arith.addf %10, %15 : vector<32x128xf32>
    %17 = vector.extract_strided_slice %1 {offsets = [0, 2], sizes = [32, 1], strides = [1, 1]} : vector<32x4xf32> to vector<32x1xf32>
    %18 = vector.extract_strided_slice %3 {offsets = [2, 0], sizes = [1, 128], strides = [1, 1]} : vector<4x128xf32> to vector<1x128xf32>
    %19 = vector.broadcast %17 : vector<32x1xf32> to vector<32x128xf32>
    %20 = vector.broadcast %18 : vector<1x128xf32> to vector<32x128xf32>
    %21 = arith.mulf %19, %20 : vector<32x128xf32>
    %22 = arith.addf %16, %21 : vector<32x128xf32>
    %23 = vector.extract_strided_slice %1 {offsets = [0, 3], sizes = [32, 1], strides = [1, 1]} : vector<32x4xf32> to vector<32x1xf32>
    %24 = vector.extract_strided_slice %3 {offsets = [3, 0], sizes = [1, 128], strides = [1, 1]} : vector<4x128xf32> to vector<1x128xf32>
    %25 = vector.broadcast %23 : vector<32x1xf32> to vector<32x128xf32>
    %26 = vector.broadcast %24 : vector<1x128xf32> to vector<32x128xf32>
    %27 = arith.mulf %25, %26 : vector<32x128xf32>
    %28 = arith.addf %22, %27 : vector<32x128xf32>
    %cst = arith.constant 0.000000e+00 : f32
    %29 = vector.broadcast %cst : f32 to vector<32x128xf32>
    %30 = arith.subf %29, %28 : vector<32x128xf32>
    %31 = math.exp %30 : vector<32x128xf32>
    %cst_6 = arith.constant 1.000000e+00 : f32
    %32 = vector.broadcast %cst_6 : f32 to vector<32x128xf32>
    %33 = arith.addf %32, %31 : vector<32x128xf32>
    %34 = tpu.reciprocal %33 {approx = true} : vector<32x128xf32> -> vector<32x128xf32>
    %35 = arith.mulf %28, %34 : vector<32x128xf32>
    %c0_7 = arith.constant 0 : index
    %c0_8 = arith.constant 0 : index
    %c0_9 = arith.constant 0 : index
    %36 = vector.load %arg5[%c0_7, %c0_8, %c0_9] : memref<2x32x128xf32, #tpu.memory_space<vmem>>, vector<1x32x128xf32>
    %37 = vector.shape_cast %36 : vector<1x32x128xf32> to vector<32x128xf32>
    %38 = vector.shape_cast %35 : vector<32x128xf32> to vector<1x32x128xf32>
    tpu.vector_store %arg5[%c0_7, %c0_8, %c0_9], %38 {strides = array<i32>} : memref<2x32x128xf32, #tpu.memory_space<vmem>>, vector<1x32x128xf32>,
    %c1 = arith.constant 1 : index
    %c0_10 = arith.constant 0 : index
    %c0_11 = arith.constant 0 : index
    %39 = vector.load %arg4[%c1, %c0_10, %c0_11] : memref<2x4x128xf32, #tpu.memory_space<vmem>>, vector<1x4x128xf32>
    %40 = vector.shape_cast %39 : vector<1x4x128xf32> to vector<4x128xf32>
    %41 = vector.extract_strided_slice %1 {offsets = [0, 0], sizes = [32, 1], strides = [1, 1]} : vector<32x4xf32> to vector<32x1xf32>
    %42 = vector.extract_strided_slice %40 {offsets = [0, 0], sizes = [1, 128], strides = [1, 1]} : vector<4x128xf32> to vector<1x128xf32>
    %43 = vector.broadcast %41 : vector<32x1xf32> to vector<32x128xf32>
    %44 = vector.broadcast %42 : vector<1x128xf32> to vector<32x128xf32>
    %45 = arith.mulf %43, %44 : vector<32x128xf32>
    %46 = vector.broadcast %0 : vector<32x1xf32> to vector<32x128xf32>
    %47 = arith.addf %45, %46 : vector<32x128xf32>
    %48 = vector.extract_strided_slice %1 {offsets = [0, 1], sizes = [32, 1], strides = [1, 1]} : vector<32x4xf32> to vector<32x1xf32>
    %49 = vector.extract_strided_slice %40 {offsets = [1, 0], sizes = [1, 128], strides = [1, 1]} : vector<4x128xf32> to vector<1x128xf32>
    %50 = vector.broadcast %48 : vector<32x1xf32> to vector<32x128xf32>
    %51 = vector.broadcast %49 : vector<1x128xf32> to vector<32x128xf32>
    %52 = arith.mulf %50, %51 : vector<32x128xf32>
    %53 = arith.addf %47, %52 : vector<32x128xf32>
    %54 = vector.extract_strided_slice %1 {offsets = [0, 2], sizes = [32, 1], strides = [1, 1]} : vector<32x4xf32> to vector<32x1xf32>
    %55 = vector.extract_strided_slice %40 {offsets = [2, 0], sizes = [1, 128], strides = [1, 1]} : vector<4x128xf32> to vector<1x128xf32>
    %56 = vector.broadcast %54 : vector<32x1xf32> to vector<32x128xf32>
    %57 = vector.broadcast %55 : vector<1x128xf32> to vector<32x128xf32>
    %58 = arith.mulf %56, %57 : vector<32x128xf32>
    %59 = arith.addf %53, %58 : vector<32x128xf32>
    %60 = vector.extract_strided_slice %1 {offsets = [0, 3], sizes = [32, 1], strides = [1, 1]} : vector<32x4xf32> to vector<32x1xf32>
    %61 = vector.extract_strided_slice %40 {offsets = [3, 0], sizes = [1, 128], strides = [1, 1]} : vector<4x128xf32> to vector<1x128xf32>
    %62 = vector.broadcast %60 : vector<32x1xf32> to vector<32x128xf32>
    %63 = vector.broadcast %61 : vector<1x128xf32> to vector<32x128xf32>
    %64 = arith.mulf %62, %63 : vector<32x128xf32>
    %65 = arith.addf %59, %64 : vector<32x128xf32>
    %cst_12 = arith.constant 0.000000e+00 : f32
    %66 = vector.broadcast %cst_12 : f32 to vector<32x128xf32>
    %67 = arith.subf %66, %65 : vector<32x128xf32>
    %68 = math.exp %67 : vector<32x128xf32>
    %cst_13 = arith.constant 1.000000e+00 : f32
    %69 = vector.broadcast %cst_13 : f32 to vector<32x128xf32>
    %70 = arith.addf %69, %68 : vector<32x128xf32>
    %71 = tpu.reciprocal %70 {approx = true} : vector<32x128xf32> -> vector<32x128xf32>
    %72 = arith.mulf %65, %71 : vector<32x128xf32>
    %c1_14 = arith.constant 1 : index
    %c0_15 = arith.constant 0 : index
    %c0_16 = arith.constant 0 : index
    %73 = vector.load %arg5[%c1_14, %c0_15, %c0_16] : memref<2x32x128xf32, #tpu.memory_space<vmem>>, vector<1x32x128xf32>
    %74 = vector.shape_cast %73 : vector<1x32x128xf32> to vector<32x128xf32>
    %75 = vector.shape_cast %72 : vector<32x128xf32> to vector<1x32x128xf32>
    tpu.vector_store %arg5[%c1_14, %c0_15, %c0_16], %75 {strides = array<i32>} : memref<2x32x128xf32, #tpu.memory_space<vmem>>, vector<1x32x128xf32>,
    return
  }
  func.func @transform_0(%arg0: i32, %arg1: i32) -> (i32, i32) {
    %c0_i32 = arith.constant 0 : i32
    %c0_i32_0 = arith.constant 0 : i32
    %c0_i32_1 = arith.constant 0 : i32
    return %c0_i32, %c0_i32_0 : i32, i32
  }
  func.func @transform_1(%arg0: i32, %arg1: i32) -> (i32, i32) {
    %c0_i32 = arith.constant 0 : i32
    %c0_i32_0 = arith.constant 0 : i32
    %c0_i32_1 = arith.constant 0 : i32
    return %c0_i32, %c0_i32_0 : i32, i32
  }
  func.func @transform_2(%arg0: i32, %arg1: i32) -> (i32, i32, i32) {
    %c0_i32 = arith.constant 0 : i32
    %c0_i32_0 = arith.constant 0 : i32
    return %arg0, %c0_i32, %arg1 : i32, i32, i32
  }
  func.func @transform_3(%arg0: i32, %arg1: i32) -> (i32, i32, i32) {
    %c0_i32 = arith.constant 0 : i32
    %c0_i32_0 = arith.constant 0 : i32
    return %arg0, %c0_i32, %arg1 : i32, i32, i32
  }
}

</mosaic_0001>

<llo_original>
// kernel: tpu_custom_call.1
$region0: #{tpu_custom_call.1}
  #allocation0 [shape = 'u32[]', space=smem, size = 0x4, offset = 0x4, fixed_abs, tag = 'smem constant byte address 0x4 - core index']
  #allocation1 [shape = 'u32[144,128]{1,0:T(1,128)}', space=vmem, size = 0x12000, scoped, tag = 'internal scratch']
  %s0 = inlined_call_operand.vmem [shape: f32[32,4], index: 0, kind: input, shape index: {}]
  %s1 = inlined_call_operand.vmem [shape: f32[32,1], index: 1, kind: input, shape index: {}]
  %s2 = inlined_call_operand.vmem [shape: f32[2,4,256], index: 2, kind: input, shape index: {}]
  %s3 = inlined_call_operand.hbm [shape: f32[2,32,256], index: 3, kind: output, shape index: {}]
  %s4 = sld [smem:[#allocation0]]
  $region86: #{tpu_custom_call.1} parent=0
    _
  %s6 = ssub.s32 1, %s4
  %s7 = scalar_select 0, %s6, %s4
  $region1: #{tpu_custom_call.1} parent=0
    #allocation2 [shape = 'u8[8192]{0}', space=vmem, size = 0x2000, scoped, tag = 'input window, operand 2']
    #allocation3 [shape = 'u8[65536]{0}', space=vmem, size = 0x10000, scoped, tag = 'output window, operand 0']
    #allocation4 [shape = 's32[2]{0}', space=sflag, size = 0x8, scoped, tag = 'scoped memory for tpu_custom_call.1']
    %8 = vsyncpa [#allocation4], 0
    %s9 = scalar_lea.sflag [#allocation4], 1
    %10 = vsyncpa %s9, 0
    loop: start=0, step=1, limit=4
    $region2: #{tpu_custom_call.1} parent=1 // loop_pre_header
      _
    $region3: #{tpu_custom_call.1} parent=1 // loop_header
      %s12 = sphi 0, %s16
      %p13 = scmp.ge.s32.totalorder %s12, 4
      %s19 = sphi 0, %s31
      %s20 = sphi 0, %s27
      %s21 = sphi 0, %s19
      %s22 = sphi 0, %s20
      %s23 = sphi 0, %s21
      %s24 = sphi 0, %s22
      %s32 = sphi 0, %s32
      %s34 = sphi 0, %s32
      %s35 = sphi 0, %s34
      %s49 = sphi 0, %s35
      %s53 = sphi 0, %s53
      %s55 = sphi 0, %s53
      %s56 = sphi 0, %s55
      %s70 = sphi 0, %s56
      %s78 = sphi 0, %s80
      %s81 = sphi 0, %s78
      %s82 = sphi 0, %s81
      %s98 = sphi 0, %s82
      %s106 = sphi 0, %s108
      %s109 = sphi 0, %s106
      %s110 = sphi 0, %s109
      %s126 = sphi 0, %s110
    $region4: #{tpu_custom_call.1} parent=1 // loop_header_branch
      %15 = sbr.rel (%p13) target = $region8
    $region5: #{tpu_custom_call.1} parent=1 // loop_body
      %s17 = ssub.s32 %s12, 1
      %s18 = ssub.s32 %s12, 2
      %s25 = sadd.s32 1, %s20
      %p26 = scmp.ge.s32.totalorder %s25, 2
      %s27 = scalar_select %p26, 0, %s25
      %s28 = sadd.s32 1, %s19
      %s29 = scalar_select %p26, %s28, %s19
      %p30 = scmp.ge.s32.totalorder %s29, 1
      %s31 = scalar_select %p30, 0, %s29
      %s33 = sadd.s32 %s32, 1
      %p36 = scmp.eq.s32.totalorder %s12, 1
      %p37 = scmp.ne.s32.totalorder %s32, %s34
      %p38 = scmp.eq.s32.totalorder %s12, 0
      %p39 = por %p37, %p38
      %p40 = scmp.ne.s32.totalorder %s32, %s34
      %p41 = scmp.eq.s32.totalorder %s17, 1
      %p42 = por %p40, %p41
      %p43 = scmp.ne.s32.totalorder %s34, %s35
      %p44 = scmp.eq.s32.totalorder %s17, 0
      %p45 = por %p43, %p44
      %p46 = scmp.ne.s32.totalorder %s34, %s35
      %p47 = scmp.eq.s32.totalorder %s18, 1
      %p48 = por %p46, %p47
      %p50 = scmp.ne.s32.totalorder %s35, %s49
      %p51 = scmp.eq.s32.totalorder %s18, 0
      %p52 = por %p50, %p51
      %s54 = sadd.s32 %s53, 1
      %p57 = scmp.eq.s32.totalorder %s12, 1
      %p58 = scmp.ne.s32.totalorder %s53, %s55
      %p59 = scmp.eq.s32.totalorder %s12, 0
      %p60 = por %p58, %p59
      %p61 = scmp.ne.s32.totalorder %s53, %s55
      %p62 = scmp.eq.s32.totalorder %s17, 1
      %p63 = por %p61, %p62
      %p64 = scmp.ne.s32.totalorder %s55, %s56
      %p65 = scmp.eq.s32.totalorder %s17, 0
      %p66 = por %p64, %p65
      %p67 = scmp.ne.s32.totalorder %s55, %s56
      %p68 = scmp.eq.s32.totalorder %s18, 1
      %p69 = por %p67, %p68
      %p71 = scmp.ne.s32.totalorder %s56, %s70
      %p72 = scmp.eq.s32.totalorder %s18, 0
      %p73 = por %p71, %p72
      %s74 = ssub.s32 %s19, %s31
      %s75 = ssub.s32 %s20, %s27
      %s76 = sor.u32 %s74, %s75
      %p77 = scmp.eq.s32.totalorder %s76, 0
      %s79 = sadd.s32 %s78, 1
      %s80 = scalar_select %p77, %s78, %s79
      %p83 = pneg %p77
      %p84 = scmp.eq.s32.totalorder %s12, 1
      %p85 = por %p83, %p84
      %p86 = scmp.ne.s32.totalorder %s78, %s81
      %p87 = scmp.eq.s32.totalorder %s12, 0
      %p88 = por %p86, %p87
      %p89 = scmp.ne.s32.totalorder %s78, %s81
      %p90 = scmp.eq.s32.totalorder %s17, 1
      %p91 = por %p89, %p90
      %p92 = scmp.ne.s32.totalorder %s81, %s82
      %p93 = scmp.eq.s32.totalorder %s17, 0
      %p94 = por %p92, %p93
      %p95 = scmp.ne.s32.totalorder %s81, %s82
      %p96 = scmp.eq.s32.totalorder %s18, 1
      %p97 = por %p95, %p96
      %p99 = scmp.ne.s32.totalorder %s82, %s98
      %p100 = scmp.eq.s32.totalorder %s18, 0
      %p101 = por %p99, %p100
      %s102 = ssub.s32 %s19, %s31
      %s103 = ssub.s32 %s20, %s27
      %s104 = sor.u32 %s102, %s103
      %p105 = scmp.eq.s32.totalorder %s104, 0
      %s107 = sadd.s32 %s106, 1
      %s108 = scalar_select %p105, %s106, %s107
      %p111 = pneg %p105
      %p112 = scmp.eq.s32.totalorder %s12, 1
      %p113 = por %p111, %p112
      %p114 = scmp.ne.s32.totalorder %s106, %s109
      %p115 = scmp.eq.s32.totalorder %s12, 0
      %p116 = por %p114, %p115
      %p117 = scmp.ne.s32.totalorder %s106, %s109
      %p118 = scmp.eq.s32.totalorder %s17, 1
      %p119 = por %p117, %p118
      %p120 = scmp.ne.s32.totalorder %s109, %s110
      %p121 = scmp.eq.s32.totalorder %s17, 0
      %p122 = por %p120, %p121
      %p123 = scmp.ne.s32.totalorder %s109, %s110
      %p124 = scmp.eq.s32.totalorder %s18, 1
      %p125 = por %p123, %p124
      %p127 = scmp.ne.s32.totalorder %s110, %s126
      %p128 = scmp.eq.s32.totalorder %s18, 0
      %p129 = por %p127, %p128
      %p130 = scmp.le.s32.totalorder 1, %s12
      %p131 = scmp.lt.s32.totalorder %s12, 3
      %p132 = pnand %p130, %p131
      %p133 = pneg %p132
      // Predicated region
      $region9: #{tpu_custom_call.1} parent=5 // pred_check
        _
      $region10: #{tpu_custom_call.1} parent=5 // pred_check_branch
        %135 = sbr.rel (%p132) target = $region12
      $region11: #{tpu_custom_call.1} parent=5 // pred_region
        %s136 = ssub.s32 %s12, 1
        // Predicated region
        $region13: #{tpu_custom_call.1} parent=11 // pred_check
          %p137 = pneg %p45
        $region14: #{tpu_custom_call.1} parent=11 // pred_check_branch
          %139 = sbr.rel (%p137) target = $region16
        $region15: #{tpu_custom_call.1} parent=11 // pred_region
          _
        $region16: #{tpu_custom_call.1} parent=11 // pred_fallthru
          _
        // Predicated region
        $region17: #{tpu_custom_call.1} parent=11 // pred_check
          %p140 = pneg %p66
        $region18: #{tpu_custom_call.1} parent=11 // pred_check_branch
          %142 = sbr.rel (%p140) target = $region20
        $region19: #{tpu_custom_call.1} parent=11 // pred_region
          _
        $region20: #{tpu_custom_call.1} parent=11 // pred_fallthru
          _
      $region12: #{tpu_custom_call.1} parent=5 // pred_fallthru
        _
      %p143 = scmp.lt.s32.totalorder %s12, 2
      // Predicated region
      $region21: #{tpu_custom_call.1} parent=5 // pred_check
        %p144 = pneg %p143
      $region22: #{tpu_custom_call.1} parent=5 // pred_check_branch
        %146 = sbr.rel (%p144) target = $region24
      $region23: #{tpu_custom_call.1} parent=5 // pred_region
        // Predicated region
        $region25: #{tpu_custom_call.1} parent=23 // pred_check
          %p147 = pneg %p88
        $region26: #{tpu_custom_call.1} parent=23 // pred_check_branch
          %149 = sbr.rel (%p147) target = $region28
        $region27: #{tpu_custom_call.1} parent=23 // pred_region
          %s150 = sand.u32 %s78, 1
          %s151 = sand.u32 %s78, 1
          %s152 = smul.addr %s151, 8
          %s153 = scalar_lea.vmem [#allocation2], %s152
          %s154 = smul.u32 2, %s19
          %s155 = smul.addr %s154, 2
          %s156 = sadd.s32 %s20, %s155
          %s157 = smul.addr %s156, 4
          %s158 = scalar_lea.vmem %s2, %s157
          // Predicated region
          $region29: #{tpu_custom_call.1} parent=27 // pred_check
            _
          $region30: #{tpu_custom_call.1} parent=27 // pred_check_branch
            %160 = sbr.rel (0) target = $region32
          $region31: #{tpu_custom_call.1} parent=27 // pred_region
            // Predicated region
            $region33: #{tpu_custom_call.1} parent=31 // pred_check
              _
            $region34: #{tpu_custom_call.1} parent=31 // pred_check_branch
              %162 = sbr.rel target = $region36
            $region35: #{tpu_custom_call.1} parent=31 // pred_region
              // Predicated region
              $region48: #{tpu_custom_call.1} parent=35 // pred_check
                _
              $region49: #{tpu_custom_call.1} parent=35 // pred_check_branch
                %179 = sbr.rel (0) target = $region51
              $region50: #{tpu_custom_call.1} parent=35 // pred_region
                loop: start=0, step=1, limit=1
                $region52: #{tpu_custom_call.1} parent=50 // loop_pre_header
                  _
                $region53: #{tpu_custom_call.1} parent=50 // loop_header
                  %s181 = sphi 0, %s185
                  %p182 = scmp.ge.s32.totalorder %s181, 1
                  %s186 = sphi %s158, %s158
                  %s187 = sphi %s153, %s153
                $region54: #{tpu_custom_call.1} parent=50 // loop_header_branch
                  %184 = sbr.rel (%p182) target = $region58
                $region55: #{tpu_custom_call.1} parent=50 // loop_body
                  _
                $region56: #{tpu_custom_call.1} parent=50 // loop_footer
                  %s185 = sadd.s32 1, %s181
                $region57: #{tpu_custom_call.1} parent=50 // loop_footer_branch
                  %180 = sbr.rel target = $region53
                $region58: #{tpu_custom_call.1} parent=50 // loop_exit
                  _
                loop: start=0, step=1, limit=1
                $region59: #{tpu_custom_call.1} parent=50 // loop_pre_header
                  _
                $region60: #{tpu_custom_call.1} parent=50 // loop_header
                  %s190 = sphi 0, %s194
                  %p191 = scmp.ge.s32.totalorder %s190, 1
                  %s195 = sphi %s158, %s158
                  %s196 = sphi %s153, %s153
                $region61: #{tpu_custom_call.1} parent=50 // loop_header_branch
                  %193 = sbr.rel (%p191) target = $region65
                $region62: #{tpu_custom_call.1} parent=50 // loop_body
                  %v197 = vld [vmem:[%s195] sm:$0xf]
                  %198 = vst [vmem:[%s196] sm:$0xf] %v197
                  %v199 = vld [vmem:[%s195 + $0x8] sm:$0xf]
                  %200 = vst [vmem:[%s196 + $0x4] sm:$0xf] %v199
                $region63: #{tpu_custom_call.1} parent=50 // loop_footer
                  %s194 = sadd.s32 1, %s190
                $region64: #{tpu_custom_call.1} parent=50 // loop_footer_branch
                  %189 = sbr.rel target = $region60
                $region65: #{tpu_custom_call.1} parent=50 // loop_exit
                  _
              $region51: #{tpu_custom_call.1} parent=35 // pred_fallthru
                _
            $region36: #{tpu_custom_call.1} parent=31 // pred_fallthru
              _
            // Predicated region
            $region37: #{tpu_custom_call.1} parent=31 // pred_check
              _
            $region38: #{tpu_custom_call.1} parent=31 // pred_check_branch
              %164 = sbr.rel (0) target = $region40
            $region39: #{tpu_custom_call.1} parent=31 // pred_region
              loop: start=0, step=1, limit=1
              $region41: #{tpu_custom_call.1} parent=39 // loop_pre_header
                _
              $region42: #{tpu_custom_call.1} parent=39 // loop_header
                %s167 = sphi 0, %s171
                %p168 = scmp.ge.s32.totalorder %s167, 1
                %s172 = sphi %s158, %s158
                %s173 = sphi %s153, %s153
              $region43: #{tpu_custom_call.1} parent=39 // loop_header_branch
                %170 = sbr.rel (%p168) target = $region47
              $region44: #{tpu_custom_call.1} parent=39 // loop_body
                %v174 = vld [vmem:[%s172] sm:$0xf]
                %175 = vst [vmem:[%s173] sm:$0xf] %v174
                %v176 = vld [vmem:[%s172 + $0x8] sm:$0xf]
                %177 = vst [vmem:[%s173 + $0x4] sm:$0xf] %v176
              $region45: #{tpu_custom_call.1} parent=39 // loop_footer
                %s171 = sadd.s32 1, %s167
              $region46: #{tpu_custom_call.1} parent=39 // loop_footer_branch
                %166 = sbr.rel target = $region42
              $region47: #{tpu_custom_call.1} parent=39 // loop_exit
                _
            $region40: #{tpu_custom_call.1} parent=31 // pred_fallthru
              _
          $region32: #{tpu_custom_call.1} parent=27 // pred_fallthru
            _
          %201 = vnop
        $region28: #{tpu_custom_call.1} parent=23 // pred_fallthru
          _
      $region24: #{tpu_custom_call.1} parent=5 // pred_fallthru
        _
      %p202 = scmp.le.s32.totalorder 1, %s12
      %p203 = scmp.lt.s32.totalorder %s12, 3
      %p204 = pnand %p202, %p203
      %p205 = pneg %p204
      // Predicated region
      $region66: #{tpu_custom_call.1} parent=5 // pred_check
        _
      $region67: #{tpu_custom_call.1} parent=5 // pred_check_branch
        %207 = sbr.rel (%p204) target = $region69
      $region68: #{tpu_custom_call.1} parent=5 // pred_region
        %s208 = ssub.s32 %s12, 1
        %s209 = sand.u32 %s81, 1
        %s210 = sand.u32 %s81, 1
        %s211 = smul.addr %s210, 8
        %s212 = scalar_lea.vmem [#allocation2], %s211
        // Predicated region
        $region70: #{tpu_custom_call.1} parent=68 // pred_check
          %p213 = pneg %p94
        $region71: #{tpu_custom_call.1} parent=68 // pred_check_branch
          %215 = sbr.rel (%p213) target = $region73
        $region72: #{tpu_custom_call.1} parent=68 // pred_region
          _
        $region73: #{tpu_custom_call.1} parent=68 // pred_fallthru
          _
        %p216 = pneg %p45
        %p217 = pneg %p42
        %p218 = pneg %p66
        %p219 = pneg %p63
        %s220 = sand.u32 %s81, 1
        %s221 = sand.u32 %s81, 1
        %s222 = smul.addr %s221, 8
        %s223 = scalar_lea.vmem [#allocation2], %s222
        %p224 = pneg %p94
        %p225 = pneg %p91
        %p226 = pneg %p122
        %p227 = pneg %p119
        %s228 = sand.u32 %s109, 1
        %s229 = scalar_lea.sflag [#allocation4], %s228
        %s230 = sand.u32 %s109, 1
        %s231 = smul.addr %s230, 64
        %s232 = scalar_lea.vmem [#allocation3], %s231
        %s233 = smul.u32 2, %s21
        %s234 = smul.u32 2, %s21
        %v235 = vld [vmem:[%s1] sm:$0xff]
        %v236 = vld [vmem:[%s1 + $0x8] sm:$0xff]
        %v237 = vld [vmem:[%s1 + $0x10] sm:$0xff]
        %v238 = vld [vmem:[%s1 + $0x18] sm:$0xff]
        %v239 = vld [vmem:[%s0] sm:$0xff]
        %v240 = vld [vmem:[%s0 + $0x8] sm:$0xff]
        %v241 = vld [vmem:[%s0 + $0x10] sm:$0xff]
        %v242 = vld [vmem:[%s0 + $0x18] sm:$0xff]
        %v243 = vld [vmem:[%s212] sm:$0xf]
        %245 = vset.pattern.permute.xlu0 0
        %246 = vperm.xlu0 %245, %v239
        %v247 = vpop.permute.xlu0 %246
        %250 = vset.pattern.permute.xlu0 0
        %251 = vperm.xlu0 %250, %v240
        %v252 = vpop.permute.xlu0 %251
        %255 = vset.pattern.permute.xlu0 0
        %256 = vperm.xlu0 %255, %v241
        %v257 = vpop.permute.xlu0 %256
        %260 = vset.pattern.permute.xlu0 0
        %261 = vperm.xlu0 %260, %v242
        %v262 = vpop.permute.xlu0 %261
        %v264 = vlaneseq
        %v265 = vshrl.u32 %v264, 7
        %v266 = vsub.s32 0, %v265
        %v267 = vrot.slane %v243, %v266
        %v268 = vmul.f32 %v247, %v267
        %v269 = vmul.f32 %v252, %v267
        %v270 = vmul.f32 %v257, %v267
        %v271 = vmul.f32 %v262, %v267
        %273 = vset.pattern.permute.xlu0 0
        %274 = vperm.xlu0 %273, %v235
        %v275 = vpop.permute.xlu0 %274
        %278 = vset.pattern.permute.xlu0 0
        %279 = vperm.xlu0 %278, %v236
        %v280 = vpop.permute.xlu0 %279
        %283 = vset.pattern.permute.xlu0 0
        %284 = vperm.xlu0 %283, %v237
        %v285 = vpop.permute.xlu0 %284
        %288 = vset.pattern.permute.xlu0 0
        %289 = vperm.xlu0 %288, %v238
        %v290 = vpop.permute.xlu0 %289
        %v292 = vadd.f32 %v268, %v275
        %v293 = vadd.f32 %v269, %v280
        %v294 = vadd.f32 %v270, %v285
        %v295 = vadd.f32 %v271, %v290
        %296 = vset.pattern.permute.xlu0 1
        %297 = vperm.xlu0 %296, %v239
        %v298 = vpop.permute.xlu0 %297
        %300 = vset.pattern.permute.xlu0 1
        %301 = vperm.xlu0 %300, %v240
        %v302 = vpop.permute.xlu0 %301
        %304 = vset.pattern.permute.xlu0 1
        %305 = vperm.xlu0 %304, %v241
        %v306 = vpop.permute.xlu0 %305
        %308 = vset.pattern.permute.xlu0 1
        %309 = vperm.xlu0 %308, %v242
        %v310 = vpop.permute.xlu0 %309
        %v312 = vlaneseq
        %v313 = vshrl.u32 %v312, 7
        %v314 = vsub.s32 1, %v313
        %v315 = vrot.slane %v243, %v314
        %v316 = vmul.f32 %v298, %v315
        %v317 = vmul.f32 %v302, %v315
        %v318 = vmul.f32 %v306, %v315
        %v319 = vmul.f32 %v310, %v315
        %v320 = vadd.f32 %v292, %v316
        %v321 = vadd.f32 %v293, %v317
        %v322 = vadd.f32 %v294, %v318
        %v323 = vadd.f32 %v295, %v319
        %324 = vset.pattern.permute.xlu0 2
        %325 = vperm.xlu0 %324, %v239
        %v326 = vpop.permute.xlu0 %325
        %328 = vset.pattern.permute.xlu0 2
        %329 = vperm.xlu0 %328, %v240
        %v330 = vpop.permute.xlu0 %329
        %332 = vset.pattern.permute.xlu0 2
        %333 = vperm.xlu0 %332, %v241
        %v334 = vpop.permute.xlu0 %333
        %336 = vset.pattern.permute.xlu0 2
        %337 = vperm.xlu0 %336, %v242
        %v338 = vpop.permute.xlu0 %337
        %v340 = vlaneseq
        %v341 = vshrl.u32 %v340, 7
        %v342 = vsub.s32 2, %v341
        %v343 = vrot.slane %v243, %v342
        %v344 = vmul.f32 %v326, %v343
        %v345 = vmul.f32 %v330, %v343
        %v346 = vmul.f32 %v334, %v343
        %v347 = vmul.f32 %v338, %v343
        %v348 = vadd.f32 %v320, %v344
        %v349 = vadd.f32 %v321, %v345
        %v350 = vadd.f32 %v322, %v346
        %v351 = vadd.f32 %v323, %v347
        %352 = vset.pattern.permute.xlu0 3
        %353 = vperm.xlu0 %352, %v239
        %v354 = vpop.permute.xlu0 %353
        %356 = vset.pattern.permute.xlu0 3
        %357 = vperm.xlu0 %356, %v240
        %v358 = vpop.permute.xlu0 %357
        %360 = vset.pattern.permute.xlu0 3
        %361 = vperm.xlu0 %360, %v241
        %v362 = vpop.permute.xlu0 %361
        %364 = vset.pattern.permute.xlu0 3
        %365 = vperm.xlu0 %364, %v242
        %v366 = vpop.permute.xlu0 %365
        %v368 = vlaneseq
        %v369 = vshrl.u32 %v368, 7
        %v370 = vsub.s32 3, %v369
        %v371 = vrot.slane %v243, %v370
        %v372 = vmul.f32 %v354, %v371
        %v373 = vmul.f32 %v358, %v371
        %v374 = vmul.f32 %v362, %v371
        %v375 = vmul.f32 %v366, %v371
        %v376 = vadd.f32 %v348, %v372
        %v377 = vadd.f32 %v349, %v373
        %v378 = vadd.f32 %v350, %v374
        %v379 = vadd.f32 %v351, %v375
        %v380 = vsub.f32 0.0, %v376
        %v381 = vsub.f32 0.0, %v377
        %v382 = vsub.f32 0.0, %v378
        %v383 = vsub.f32 0.0, %v379
        %v384 = vmul.f32 %v380, 1.442695
        %v385 = vpow.pop %v384
        %v386 = vmul.f32 %v381, 1.442695
        %v387 = vpow.pop %v386
        %v388 = vmul.f32 %v382, 1.442695
        %v389 = vpow.pop %v388
        %v390 = vmul.f32 %v383, 1.442695
        %v391 = vpow.pop %v390
        %v392 = vadd.f32 %v385, 1.0
        %v393 = vadd.f32 %v387, 1.0
        %v394 = vadd.f32 %v389, 1.0
        %v395 = vadd.f32 %v391, 1.0
        %v396 = vrcp.pop %v392
        %v397 = vrcp.pop %v393
        %v398 = vrcp.pop %v394
        %v399 = vrcp.pop %v395
        %v400 = vmul.f32 %v376, %v396
        %v401 = vmul.f32 %v377, %v397
        %v402 = vmul.f32 %v378, %v398
        %v403 = vmul.f32 %v379, %v399
        %404 = vst [vmem:[%s232] sm:$0xff] %v400
        %405 = vst [vmem:[%s232 + $0x8] sm:$0xff] %v401
        %406 = vst [vmem:[%s232 + $0x10] sm:$0xff] %v402
        %407 = vst [vmem:[%s232 + $0x18] sm:$0xff] %v403
        %s408 = scalar_lea.vmem %s212, 4 [#allocation2]
        %v409 = vld [vmem:[%s408] sm:$0xf]
        %v410 = vlaneseq
        %v411 = vshrl.u32 %v410, 7
        %v412 = vsub.s32 0, %v411
        %v413 = vrot.slane %v409, %v412
        %v414 = vmul.f32 %v247, %v413
        %v415 = vmul.f32 %v252, %v413
        %v416 = vmul.f32 %v257, %v413
        %v417 = vmul.f32 %v262, %v413
        %v418 = vadd.f32 %v414, %v275
        %v419 = vadd.f32 %v415, %v280
        %v420 = vadd.f32 %v416, %v285
        %v421 = vadd.f32 %v417, %v290
        %v422 = vlaneseq
        %v423 = vshrl.u32 %v422, 7
        %v424 = vsub.s32 1, %v423
        %v425 = vrot.slane %v409, %v424
        %v426 = vmul.f32 %v298, %v425
        %v427 = vmul.f32 %v302, %v425
        %v428 = vmul.f32 %v306, %v425
        %v429 = vmul.f32 %v310, %v425
        %v430 = vadd.f32 %v418, %v426
        %v431 = vadd.f32 %v419, %v427
        %v432 = vadd.f32 %v420, %v428
        %v433 = vadd.f32 %v421, %v429
        %v434 = vlaneseq
        %v435 = vshrl.u32 %v434, 7
        %v436 = vsub.s32 2, %v435
        %v437 = vrot.slane %v409, %v436
        %v438 = vmul.f32 %v326, %v437
        %v439 = vmul.f32 %v330, %v437
        %v440 = vmul.f32 %v334, %v437
        %v441 = vmul.f32 %v338, %v437
        %v442 = vadd.f32 %v430, %v438
        %v443 = vadd.f32 %v431, %v439
        %v444 = vadd.f32 %v432, %v440
        %v445 = vadd.f32 %v433, %v441
        %v446 = vlaneseq
        %v447 = vshrl.u32 %v446, 7
        %v448 = vsub.s32 3, %v447
        %v449 = vrot.slane %v409, %v448
        %v450 = vmul.f32 %v354, %v449
        %v451 = vmul.f32 %v358, %v449
        %v452 = vmul.f32 %v362, %v449
        %v453 = vmul.f32 %v366, %v449
        %v454 = vadd.f32 %v442, %v450
        %v455 = vadd.f32 %v443, %v451
        %v456 = vadd.f32 %v444, %v452
        %v457 = vadd.f32 %v445, %v453
        %v458 = vsub.f32 0.0, %v454
        %v459 = vsub.f32 0.0, %v455
        %v460 = vsub.f32 0.0, %v456
        %v461 = vsub.f32 0.0, %v457
        %v462 = vmul.f32 %v458, 1.442695
        %v463 = vpow.pop %v462
        %v464 = vmul.f32 %v459, 1.442695
        %v465 = vpow.pop %v464
        %v466 = vmul.f32 %v460, 1.442695
        %v467 = vpow.pop %v466
        %v468 = vmul.f32 %v461, 1.442695
        %v469 = vpow.pop %v468
        %v470 = vadd.f32 %v463, 1.0
        %v471 = vadd.f32 %v465, 1.0
        %v472 = vadd.f32 %v467, 1.0
        %v473 = vadd.f32 %v469, 1.0
        %v474 = vrcp.pop %v470
        %v475 = vrcp.pop %v471
        %v476 = vrcp.pop %v472
        %v477 = vrcp.pop %v473
        %v478 = vmul.f32 %v454, %v474
        %v479 = vmul.f32 %v455, %v475
        %v480 = vmul.f32 %v456, %v476
        %v481 = vmul.f32 %v457, %v477
        %s482 = scalar_lea.vmem %s232, 32 [#allocation3]
        %483 = vst [vmem:[%s482] sm:$0xff] %v478
        %484 = vst [vmem:[%s482 + $0x8] sm:$0xff] %v479
        %485 = vst [vmem:[%s482 + $0x10] sm:$0xff] %v480
        %486 = vst [vmem:[%s482 + $0x18] sm:$0xff] %v481
        %s487 = sand.u32 %s109, 1
        %s488 = scalar_lea.sflag [#allocation4], %s487
        %s489 = sand.u32 %s109, 1
        %s490 = smul.addr %s489, 64
        %s491 = scalar_lea.vmem [#allocation3], %s490
        // Predicated region
        $region74: #{tpu_custom_call.1} parent=68 // pred_check
          %p492 = pneg %p119
        $region75: #{tpu_custom_call.1} parent=68 // pred_check_branch
          %494 = sbr.rel (%p492) target = $region77
        $region76: #{tpu_custom_call.1} parent=68 // pred_region
          %s495 = smul.u32 2, %s21
          %s497 = ssub.s32 1024, 1024
          %498 = vsyncadd %s488, %s497
          %s499 = smul.addr %s495, 8
          %s500 = sadd.s32 %s22, %s499
          %s501 = smul.addr %s500, 128
          %s502 = scalar_lea.hbm %s3, %s501
          %s503 = sshll.u32 %s491, 4
          %s504 = int_to_ptr.vmem [resolvable:$true] %s503
          %509 = dma.vmem_to_hbm [thread:$0]  %s504, 1024, %s502, %s488, 128, 256, 8
        $region77: #{tpu_custom_call.1} parent=68 // pred_fallthru
          _
      $region69: #{tpu_custom_call.1} parent=5 // pred_fallthru
        _
      %p510 = scmp.le.s32.totalorder 2, %s12
      // Predicated region
      $region78: #{tpu_custom_call.1} parent=5 // pred_check
        %p511 = pneg %p510
      $region79: #{tpu_custom_call.1} parent=5 // pred_check_branch
        %513 = sbr.rel (%p511) target = $region81
      $region80: #{tpu_custom_call.1} parent=5 // pred_region
        %s514 = ssub.s32 %s12, 2
        // Predicated region
        $region82: #{tpu_custom_call.1} parent=80 // pred_check
          %p515 = pneg %p125
        $region83: #{tpu_custom_call.1} parent=80 // pred_check_branch
          %517 = sbr.rel (%p515) target = $region85
        $region84: #{tpu_custom_call.1} parent=80 // pred_region
          %s518 = sand.u32 %s110, 1
          %s519 = scalar_lea.sflag [#allocation4], %s518
          %s520 = sand.u32 %s110, 1
          %s521 = smul.addr %s520, 64
          %s522 = scalar_lea.vmem [#allocation3], %s521
          %523 = dma.done %s519, 1024
        $region85: #{tpu_custom_call.1} parent=80 // pred_fallthru
          _
      $region81: #{tpu_custom_call.1} parent=5 // pred_fallthru
        _
    $region6: #{tpu_custom_call.1} parent=1 // loop_footer
      %s16 = sadd.s32 1, %s12
    $region7: #{tpu_custom_call.1} parent=1 // loop_footer_branch
      %11 = sbr.rel target = $region3
    $region8: #{tpu_custom_call.1} parent=1 // loop_exit
      _
    %524 = vsyncpa [#allocation4], 1
    %s525 = scalar_lea.sflag [#allocation4], 1
    %526 = vsyncpa %s525, 1

</llo_original>
